<compile_context>
chip_gen: v7x
topology: tpu7x:2x2x1
jax: 0.10.0
libtpu: 0.0.40
codegen_flags: <defaults>
</compile_context>

<pallas_src>
import jax
import jax.numpy as jnp
from jax.experimental import pallas as pl
from jax.experimental.pallas import tpu as pltpu


def _augment_kernel(x_ref, idx_ref, w_ref, o_ref):
    # x_ref  : (1, SC, HWp)  bf16   flattened images for one batch element (full K)
    # idx_ref: (1, 4, TN)    int32  source pixel index of each bilinear tap
    # w_ref  : (1, 4, TN)    f32    bilinear weight of each tap (0 where out-of-bounds)
    # o_ref  : (1, SC, TN)   f32
    x = x_ref[0]                                     # (SC, HWp) bf16
    idx = idx_ref[0]                                 # (4, TN)
    w = w_ref[0]                                     # (4, TN)
    HWp = x.shape[1]
    TN = idx.shape[1]

    # Build the (HWp, TN) one-hot selection slab on the VPU: sel[src, dst] = weight.
    row = jax.lax.broadcasted_iota(jnp.int32, (HWp, TN), 0)
    sel = jnp.zeros((HWp, TN), jnp.float32)
    for t in range(4):                               # 4 taps, unrolled at trace time
        sel = sel + jnp.where(row == idx[t:t + 1, :], w[t:t + 1, :], 0.0)

    # MXU combine: out = x @ sel  (bf16 x bf16, f32 accumulate), lane-dense stores.
    o_ref[0] = jnp.dot(x, sel.astype(jnp.bfloat16),
                       preferred_element_type=jnp.float32).astype(o_ref.dtype)


def _build_taps(angle_deg, hflip, vflip, H, W):
    """Per output pixel: 4 source indices + 4 bilinear weights implementing
    rotate(vflip(hflip(img))) with zero padding and center (W-1)/2, (H-1)/2."""
    HW = H * W
    yo, xo = jnp.meshgrid(jnp.arange(H, dtype=jnp.float32),
                          jnp.arange(W, dtype=jnp.float32), indexing="ij")
    cy, cx = (H - 1) / 2.0, (W - 1) / 2.0
    theta = angle_deg * jnp.pi / 180.0
    c, s = jnp.cos(theta), jnp.sin(theta)
    dx, dy = xo - cx, yo - cy
    # Inverse mapping: source coords (in the already-flipped image) for each output px.
    # TODO(synk): rotation sign convention assumed equivalent to Kornia's; with the
    # symmetric Uniform(-30, 30) sampling the direction is distributionally identical.
    xs = c * dx + s * dy + cx
    ys = -s * dx + c * dy + cy
    x0, y0 = jnp.floor(xs), jnp.floor(ys)
    wx, wy = xs - x0, ys - y0

    idxs, wts = [], []
    for oy, ox, wgt in ((y0,     x0,     (1.0 - wy) * (1.0 - wx)),
                        (y0,     x0 + 1, (1.0 - wy) * wx),
                        (y0 + 1, x0,     wy * (1.0 - wx)),
                        (y0 + 1, x0 + 1, wy * wx)):
        valid = (oy >= 0) & (oy <= H - 1) & (ox >= 0) & (ox <= W - 1)
        yi = jnp.clip(oy, 0, H - 1).astype(jnp.int32)
        xi = jnp.clip(ox, 0, W - 1).astype(jnp.int32)
        # Fold the flips in: coordinate in the flipped image -> original pixel index.
        yi = jnp.where(vflip, H - 1 - yi, yi)
        xi = jnp.where(hflip, W - 1 - xi, xi)
        idxs.append((yi * W + xi).reshape(HW))
        wts.append((wgt * valid.astype(jnp.float32)).reshape(HW))
    return jnp.stack(idxs).astype(jnp.int32), jnp.stack(wts)   # (4, HW), (4, HW)


def _pick_tn(HWp, SC, budget_bytes=12 * 1024 * 1024):
    """Largest lane-multiple output tile whose blocks + in-kernel temps fit the budget
    (budget < v5e's 16 MiB scoped-VMEM default, so no vmem_limit override needed)."""
    cands = []
    for t in (HWp, 1024, 512, 256, 128):
        if t <= HWp and HWp % t == 0 and t not in cands:
            cands.append(t)
    for tn in cands:
        per_step = (
            2 * SC * HWp * 2              # x block (bf16), double-buffered
            + 2 * 4 * tn * (4 + 4)        # idx (i32) + w (f32) blocks, double-buffered
            + 2 * SC * tn * 4             # out block (f32), double-buffered
            + HWp * tn * (4 + 4 + 2)      # in-kernel iota + f32 sel + bf16 sel temps
        )
        if per_step <= budget_bytes:
            return tn
    # TODO(synk): images so large that even TN=128 overflows VMEM would need a
    # K-tiled (accumulator) variant; not needed at augmentation-typical sizes.
    return cands[-1]


def sequence_augmentation(x, hflip, vflip, angles_deg):
    """x: (B, S, C, H, W); per-batch flip flags + rotation angle applied identically to
    every image in the sequence (sequence-consistent augmentation)."""
    B, S, C, H, W = x.shape
    SC, HW = S * C, H * W
    HWp = ((HW + 127) // 128) * 128              # pad to lane multiple (no masked vst)

    # O(HW) host-side prep: 4 taps per output pixel (no HW x HW matrix, no scatter).
    idx, w = jax.vmap(lambda a, h, v: _build_taps(a, h, v, H, W))(
        angles_deg, hflip, vflip)                # (B, 4, HW) i32 / f32
    xf = x.reshape(B, SC, HW).astype(jnp.bfloat16)
    if HWp != HW:
        pad = HWp - HW
        idx = jnp.pad(idx, ((0, 0), (0, 0), (0, pad)))
        w = jnp.pad(w, ((0, 0), (0, 0), (0, pad)))
        xf = jnp.pad(xf, ((0, 0), (0, 0), (0, pad)))

    TN = _pick_tn(HWp, SC)
    n_tiles = HWp // TN

    out = pl.pallas_call(
        _augment_kernel,
        out_shape=jax.ShapeDtypeStruct((B, SC, HWp), x.dtype),
        grid_spec=pltpu.PrefetchScalarGridSpec(
            num_scalar_prefetch=0,
            grid=(B, n_tiles),                   # B outer, N inner: x not re-DMA'd per tile
            in_specs=[
                pl.BlockSpec((1, SC, HWp), lambda b, n: (b, 0, 0)),   # x (full K)
                pl.BlockSpec((1, 4, TN),  lambda b, n: (b, 0, n)),    # tap indices
                pl.BlockSpec((1, 4, TN),  lambda b, n: (b, 0, n)),    # tap weights
            ],
            out_specs=pl.BlockSpec((1, SC, TN), lambda b, n: (b, 0, n)),
        ),
        compiler_params=pltpu.CompilerParams(
            dimension_semantics=("parallel", "arbitrary")),
        cost_estimate=pl.CostEstimate(
            flops=int(2 * B * SC * HWp * HWp + 12 * B * HWp * HWp),
            transcendentals=0,
            bytes_accessed=int(B * (SC * HWp * 2 + 4 * HWp * 8 + SC * HWp * 4)),
        ),
    )(xf, idx, w)

    if HWp != HW:
        out = out[:, :, :HW]
    return out.reshape(B, S, C, H, W)


if __name__ == "__main__":
    key = jax.random.PRNGKey(0)
    k_x, k_h, k_v, k_r = jax.random.split(key, 4)

    # (batch, sequence_length, bands, height, width)
    B, S, C, H, W = 2, 4, 4, 16, 16
    x = jax.random.normal(k_x, (B, S, C, H, W), dtype=jnp.float32)

    # Sequence-consistent random parameters (one set per batch element), mirroring
    # hflip/vflip/rotate.forward_parameters.
    # TODO(synk): Kornia's internal RNG/param distributions replaced with jax.random
    # equivalents (Bernoulli(0.5) flips, Uniform(-30, 30) degrees).
    hflip = jax.random.bernoulli(k_h, 0.5, (B,))
    vflip = jax.random.bernoulli(k_v, 0.5, (B,))
    angles = jax.random.uniform(k_r, (B,), minval=-30.0, maxval=30.0)

    out = sequence_augmentation(x, hflip, vflip, angles)
    jax.block_until_ready(out)
    assert out.shape == x.shape and out.dtype == x.dtype
    print("KERNEL_OK")
</pallas_src>

<mosaic_0001>
module attributes {stable_mosaic.version = 11 : i64} {
  func.func @_augment_kernel(%arg0: i32, %arg1: i32, %arg2: memref<1x16x256xbf16, #tpu.memory_space<vmem>>, %arg3: memref<1x4x256xi32, #tpu.memory_space<vmem>>, %arg4: memref<1x4x256xf32, #tpu.memory_space<vmem>>, %arg5: memref<1x16x256xf32, #tpu.memory_space<vmem>>) attributes {dimension_semantics = [#tpu.dimension_semantics<parallel>, #tpu.dimension_semantics<arbitrary>], iteration_bounds = array<i64: 2, 1>, scalar_prefetch = 0 : i64, scratch_operands = 0 : i64, tpu.core_type = #tpu.core_type<tc>, window_params = [{transform_indices = @transform_0, window_bounds = array<i64: 1, 16, 256>}, {transform_indices = @transform_1, window_bounds = array<i64: 1, 4, 256>}, {transform_indices = @transform_2, window_bounds = array<i64: 1, 4, 256>}, {transform_indices = @transform_3, window_bounds = array<i64: 1, 16, 256>}]} {
    %c0 = arith.constant 0 : index
    %c0_0 = arith.constant 0 : index
    %c0_1 = arith.constant 0 : index
    %0 = vector.load %arg2[%c0, %c0_0, %c0_1] : memref<1x16x256xbf16, #tpu.memory_space<vmem>>, vector<1x16x256xbf16>
    %1 = vector.shape_cast %0 : vector<1x16x256xbf16> to vector<16x256xbf16>
    %c0_2 = arith.constant 0 : index
    %c0_3 = arith.constant 0 : index
    %c0_4 = arith.constant 0 : index
    %2 = vector.load %arg3[%c0_2, %c0_3, %c0_4] : memref<1x4x256xi32, #tpu.memory_space<vmem>>, vector<1x4x256xi32>
    %3 = vector.shape_cast %2 : vector<1x4x256xi32> to vector<4x256xi32>
    %c0_5 = arith.constant 0 : index
    %c0_6 = arith.constant 0 : index
    %c0_7 = arith.constant 0 : index
    %4 = vector.load %arg4[%c0_5, %c0_6, %c0_7] : memref<1x4x256xf32, #tpu.memory_space<vmem>>, vector<1x4x256xf32>
    %5 = vector.shape_cast %4 : vector<1x4x256xf32> to vector<4x256xf32>
    %6 = tpu.iota {dimensions = array<i32: 0>} : vector<256x256xi32>
    %cst = arith.constant 0.000000e+00 : f32
    %7 = vector.broadcast %cst : f32 to vector<256x256xf32>
    %8 = vector.extract_strided_slice %3 {offsets = [0, 0], sizes = [1, 256], strides = [1, 1]} : vector<4x256xi32> to vector<1x256xi32>
    %9 = vector.broadcast %8 : vector<1x256xi32> to vector<256x256xi32>
    %10 = arith.cmpi eq, %6, %9 : vector<256x256xi32>
    %11 = vector.extract_strided_slice %5 {offsets = [0, 0], sizes = [1, 256], strides = [1, 1]} : vector<4x256xf32> to vector<1x256xf32>
    %cst_8 = arith.constant 0.000000e+00 : f32
    %12 = vector.shape_cast %11 : vector<1x256xf32> to vector<1x256xf32>
    %13 = vector.broadcast %12 : vector<1x256xf32> to vector<256x256xf32>
    %14 = vector.broadcast %cst_8 : f32 to vector<256x256xf32>
    %15 = arith.select %10, %13, %14 : vector<256x256xi1>, vector<256x256xf32>
    %16 = arith.addf %7, %15 : vector<256x256xf32>
    %17 = vector.extract_strided_slice %3 {offsets = [1, 0], sizes = [1, 256], strides = [1, 1]} : vector<4x256xi32> to vector<1x256xi32>
    %18 = vector.broadcast %17 : vector<1x256xi32> to vector<256x256xi32>
    %19 = arith.cmpi eq, %6, %18 : vector<256x256xi32>
    %20 = vector.extract_strided_slice %5 {offsets = [1, 0], sizes = [1, 256], strides = [1, 1]} : vector<4x256xf32> to vector<1x256xf32>
    %cst_9 = arith.constant 0.000000e+00 : f32
    %21 = vector.shape_cast %20 : vector<1x256xf32> to vector<1x256xf32>
    %22 = vector.broadcast %21 : vector<1x256xf32> to vector<256x256xf32>
    %23 = vector.broadcast %cst_9 : f32 to vector<256x256xf32>
    %24 = arith.select %19, %22, %23 : vector<256x256xi1>, vector<256x256xf32>
    %25 = arith.addf %16, %24 : vector<256x256xf32>
    %26 = vector.extract_strided_slice %3 {offsets = [2, 0], sizes = [1, 256], strides = [1, 1]} : vector<4x256xi32> to vector<1x256xi32>
    %27 = vector.broadcast %26 : vector<1x256xi32> to vector<256x256xi32>
    %28 = arith.cmpi eq, %6, %27 : vector<256x256xi32>
    %29 = vector.extract_strided_slice %5 {offsets = [2, 0], sizes = [1, 256], strides = [1, 1]} : vector<4x256xf32> to vector<1x256xf32>
    %cst_10 = arith.constant 0.000000e+00 : f32
    %30 = vector.shape_cast %29 : vector<1x256xf32> to vector<1x256xf32>
    %31 = vector.broadcast %30 : vector<1x256xf32> to vector<256x256xf32>
    %32 = vector.broadcast %cst_10 : f32 to vector<256x256xf32>
    %33 = arith.select %28, %31, %32 : vector<256x256xi1>, vector<256x256xf32>
    %34 = arith.addf %25, %33 : vector<256x256xf32>
    %35 = vector.extract_strided_slice %3 {offsets = [3, 0], sizes = [1, 256], strides = [1, 1]} : vector<4x256xi32> to vector<1x256xi32>
    %36 = vector.broadcast %35 : vector<1x256xi32> to vector<256x256xi32>
    %37 = arith.cmpi eq, %6, %36 : vector<256x256xi32>
    %38 = vector.extract_strided_slice %5 {offsets = [3, 0], sizes = [1, 256], strides = [1, 1]} : vector<4x256xf32> to vector<1x256xf32>
    %cst_11 = arith.constant 0.000000e+00 : f32
    %39 = vector.shape_cast %38 : vector<1x256xf32> to vector<1x256xf32>
    %40 = vector.broadcast %39 : vector<1x256xf32> to vector<256x256xf32>
    %41 = vector.broadcast %cst_11 : f32 to vector<256x256xf32>
    %42 = arith.select %37, %40, %41 : vector<256x256xi1>, vector<256x256xf32>
    %43 = arith.addf %34, %42 : vector<256x256xf32>
    %44 = arith.truncf %43 : vector<256x256xf32> to vector<256x256xbf16>
    %cst_12 = arith.constant dense<0.000000e+00> : vector<16x256xf32>
    %45 = tpu.matmul %1, %44, %cst_12 {dimension_numbers = #tpu.dot_dimension_numbers<[1], [0], [0], [1], [0, 0, 1, 1], [], []>} : vector<16x256xbf16>, vector<256x256xbf16>, vector<16x256xf32> -> vector<16x256xf32>
    %c0_13 = arith.constant 0 : index
    %c0_14 = arith.constant 0 : index
    %c0_15 = arith.constant 0 : index
    %46 = vector.load %arg5[%c0_13, %c0_14, %c0_15] : memref<1x16x256xf32, #tpu.memory_space<vmem>>, vector<1x16x256xf32>
    %47 = vector.shape_cast %46 : vector<1x16x256xf32> to vector<16x256xf32>
    %48 = vector.shape_cast %45 : vector<16x256xf32> to vector<1x16x256xf32>
    tpu.vector_store %arg5[%c0_13, %c0_14, %c0_15], %48 {strides = array<i32>} : memref<1x16x256xf32, #tpu.memory_space<vmem>>, vector<1x16x256xf32>,
    return
  }
  func.func @transform_0(%arg0: i32, %arg1: i32) -> (i32, i32, i32) {
    %c0_i32 = arith.constant 0 : i32
    %c0_i32_0 = arith.constant 0 : i32
    %c0_i32_1 = arith.constant 0 : i32
    return %arg0, %c0_i32, %c0_i32_0 : i32, i32, i32
  }
  func.func @transform_1(%arg0: i32, %arg1: i32) -> (i32, i32, i32) {
    %c0_i32 = arith.constant 0 : i32
    %c0_i32_0 = arith.constant 0 : i32
    return %arg0, %c0_i32, %arg1 : i32, i32, i32
  }
  func.func @transform_2(%arg0: i32, %arg1: i32) -> (i32, i32, i32) {
    %c0_i32 = arith.constant 0 : i32
    %c0_i32_0 = arith.constant 0 : i32
    return %arg0, %c0_i32, %arg1 : i32, i32, i32
  }
  func.func @transform_3(%arg0: i32, %arg1: i32) -> (i32, i32, i32) {
    %c0_i32 = arith.constant 0 : i32
    %c0_i32_0 = arith.constant 0 : i32
    return %arg0, %c0_i32, %arg1 : i32, i32, i32
  }
}

</mosaic_0001>

<llo_original>
// kernel: tpu_custom_call.1
$region0: #{tpu_custom_call.1}
  #allocation0 [shape = 'u32[]', space=smem, size = 0x4, offset = 0x4, fixed_abs, tag = 'smem constant byte address 0x4 - core index']
  #allocation1 [shape = 'u32[144,128]{1,0:T(1,128)}', space=vmem, size = 0x12000, scoped, tag = 'internal scratch']
  %s0 = inlined_call_operand.hbm [shape: bf16[2,16,256], index: 0, kind: input, shape index: {}]
  %s1 = inlined_call_operand.hbm [shape: s32[2,4,256], index: 1, kind: input, shape index: {}]
  %s2 = inlined_call_operand.hbm [shape: f32[2,4,256], index: 2, kind: input, shape index: {}]
  %s3 = inlined_call_operand.hbm [shape: f32[2,16,256], index: 3, kind: output, shape index: {}]
  %s4 = sld [smem:[#allocation0]]
  $region57: #{tpu_custom_call.1} parent=0
    _
  %s6 = ssub.s32 1, %s4
  %s7 = scalar_select 0, %s6, %s4
  $region1: #{tpu_custom_call.1} parent=0
    #allocation2 [shape = 'u8[16384]{0}', space=vmem, size = 0x4000, scoped, tag = 'input window, operand 0']
    #allocation3 [shape = 's32[2]{0}', space=sflag, size = 0x8, scoped, tag = 'scoped memory for tpu_custom_call.1']
    #allocation4 [shape = 's32[2]{0}', space=sflag, size = 0x8, scoped, tag = 'scoped memory for tpu_custom_call.1']
    #allocation5 [shape = 'u8[8192]{0}', space=vmem, size = 0x2000, scoped, tag = 'input window, operand 1']
    #allocation6 [shape = 's32[2]{0}', space=sflag, size = 0x8, scoped, tag = 'scoped memory for tpu_custom_call.1']
    #allocation7 [shape = 'u8[8192]{0}', space=vmem, size = 0x2000, scoped, tag = 'input window, operand 2']
    #allocation8 [shape = 'u8[32768]{0}', space=vmem, size = 0x8000, scoped, tag = 'output window, operand 0']
    %8 = vsyncpa [#allocation3], 0
    %s9 = scalar_lea.sflag [#allocation3], 1
    %10 = vsyncpa %s9, 0
    %11 = vsyncpa [#allocation6], 0
    %s12 = scalar_lea.sflag [#allocation6], 1
    %13 = vsyncpa %s12, 0
    %14 = vsyncpa [#allocation4], 0
    %s15 = scalar_lea.sflag [#allocation4], 1
    %16 = vsyncpa %s15, 0
    loop: start=0, step=1, limit=4
    $region2: #{tpu_custom_call.1} parent=1 // loop_pre_header
      _
    $region3: #{tpu_custom_call.1} parent=1 // loop_header
      %s18 = sphi 0, %s22
      %p19 = scmp.ge.s32.totalorder %s18, 4
      %s25 = sphi 0, %s37
      %s26 = sphi 0, %s33
      %s27 = sphi 0, %s25
      %s28 = sphi 0, %s26
      %s29 = sphi 0, %s27
      %s30 = sphi 0, %s28
      %s40 = sphi 0, %s42
      %s43 = sphi 0, %s40
      %s44 = sphi 0, %s43
      %s60 = sphi 0, %s44
      %s68 = sphi 0, %s70
      %s71 = sphi 0, %s68
      %s72 = sphi 0, %s71
      %s88 = sphi 0, %s72
      %s96 = sphi 0, %s98
      %s99 = sphi 0, %s96
      %s100 = sphi 0, %s99
      %s116 = sphi 0, %s100
      %s124 = sphi 0, %s126
      %s127 = sphi 0, %s124
      %s128 = sphi 0, %s127
      %s144 = sphi 0, %s128
    $region4: #{tpu_custom_call.1} parent=1 // loop_header_branch
      %21 = sbr.rel (%p19) target = $region8
    $region5: #{tpu_custom_call.1} parent=1 // loop_body
      %s23 = ssub.s32 %s18, 1
      %s24 = ssub.s32 %s18, 2
      %s31 = sadd.s32 1, %s26
      %p32 = scmp.ge.s32.totalorder %s31, 1
      %s33 = scalar_select %p32, 0, %s31
      %s34 = sadd.s32 1, %s25
      %s35 = scalar_select %p32, %s34, %s25
      %p36 = scmp.ge.s32.totalorder %s35, 2
      %s37 = scalar_select %p36, 0, %s35
      %s38 = ssub.s32 %s25, %s37
      %p39 = scmp.eq.s32.totalorder %s38, 0
      %s41 = sadd.s32 %s40, 1
      %s42 = scalar_select %p39, %s40, %s41
      %p45 = pneg %p39
      %p46 = scmp.eq.s32.totalorder %s18, 1
      %p47 = por %p45, %p46
      %p48 = scmp.ne.s32.totalorder %s40, %s43
      %p49 = scmp.eq.s32.totalorder %s18, 0
      %p50 = por %p48, %p49
      %p51 = scmp.ne.s32.totalorder %s40, %s43
      %p52 = scmp.eq.s32.totalorder %s23, 1
      %p53 = por %p51, %p52
      %p54 = scmp.ne.s32.totalorder %s43, %s44
      %p55 = scmp.eq.s32.totalorder %s23, 0
      %p56 = por %p54, %p55
      %p57 = scmp.ne.s32.totalorder %s43, %s44
      %p58 = scmp.eq.s32.totalorder %s24, 1
      %p59 = por %p57, %p58
      %p61 = scmp.ne.s32.totalorder %s44, %s60
      %p62 = scmp.eq.s32.totalorder %s24, 0
      %p63 = por %p61, %p62
      %s64 = ssub.s32 %s25, %s37
      %s65 = ssub.s32 %s26, %s33
      %s66 = sor.u32 %s64, %s65
      %p67 = scmp.eq.s32.totalorder %s66, 0
      %s69 = sadd.s32 %s68, 1
      %s70 = scalar_select %p67, %s68, %s69
      %p73 = pneg %p67
      %p74 = scmp.eq.s32.totalorder %s18, 1
      %p75 = por %p73, %p74
      %p76 = scmp.ne.s32.totalorder %s68, %s71
      %p77 = scmp.eq.s32.totalorder %s18, 0
      %p78 = por %p76, %p77
      %p79 = scmp.ne.s32.totalorder %s68, %s71
      %p80 = scmp.eq.s32.totalorder %s23, 1
      %p81 = por %p79, %p80
      %p82 = scmp.ne.s32.totalorder %s71, %s72
      %p83 = scmp.eq.s32.totalorder %s23, 0
      %p84 = por %p82, %p83
      %p85 = scmp.ne.s32.totalorder %s71, %s72
      %p86 = scmp.eq.s32.totalorder %s24, 1
      %p87 = por %p85, %p86
      %p89 = scmp.ne.s32.totalorder %s72, %s88
      %p90 = scmp.eq.s32.totalorder %s24, 0
      %p91 = por %p89, %p90
      %s92 = ssub.s32 %s25, %s37
      %s93 = ssub.s32 %s26, %s33
      %s94 = sor.u32 %s92, %s93
      %p95 = scmp.eq.s32.totalorder %s94, 0
      %s97 = sadd.s32 %s96, 1
      %s98 = scalar_select %p95, %s96, %s97
      %p101 = pneg %p95
      %p102 = scmp.eq.s32.totalorder %s18, 1
      %p103 = por %p101, %p102
      %p104 = scmp.ne.s32.totalorder %s96, %s99
      %p105 = scmp.eq.s32.totalorder %s18, 0
      %p106 = por %p104, %p105
      %p107 = scmp.ne.s32.totalorder %s96, %s99
      %p108 = scmp.eq.s32.totalorder %s23, 1
      %p109 = por %p107, %p108
      %p110 = scmp.ne.s32.totalorder %s99, %s100
      %p111 = scmp.eq.s32.totalorder %s23, 0
      %p112 = por %p110, %p111
      %p113 = scmp.ne.s32.totalorder %s99, %s100
      %p114 = scmp.eq.s32.totalorder %s24, 1
      %p115 = por %p113, %p114
      %p117 = scmp.ne.s32.totalorder %s100, %s116
      %p118 = scmp.eq.s32.totalorder %s24, 0
      %p119 = por %p117, %p118
      %s120 = ssub.s32 %s25, %s37
      %s121 = ssub.s32 %s26, %s33
      %s122 = sor.u32 %s120, %s121
      %p123 = scmp.eq.s32.totalorder %s122, 0
      %s125 = sadd.s32 %s124, 1
      %s126 = scalar_select %p123, %s124, %s125
      %p129 = pneg %p123
      %p130 = scmp.eq.s32.totalorder %s18, 1
      %p131 = por %p129, %p130
      %p132 = scmp.ne.s32.totalorder %s124, %s127
      %p133 = scmp.eq.s32.totalorder %s18, 0
      %p134 = por %p132, %p133
      %p135 = scmp.ne.s32.totalorder %s124, %s127
      %p136 = scmp.eq.s32.totalorder %s23, 1
      %p137 = por %p135, %p136
      %p138 = scmp.ne.s32.totalorder %s127, %s128
      %p139 = scmp.eq.s32.totalorder %s23, 0
      %p140 = por %p138, %p139
      %p141 = scmp.ne.s32.totalorder %s127, %s128
      %p142 = scmp.eq.s32.totalorder %s24, 1
      %p143 = por %p141, %p142
      %p145 = scmp.ne.s32.totalorder %s128, %s144
      %p146 = scmp.eq.s32.totalorder %s24, 0
      %p147 = por %p145, %p146
      %p148 = scmp.le.s32.totalorder 1, %s18
      %p149 = scmp.lt.s32.totalorder %s18, 3
      %p150 = pnand %p148, %p149
      %p151 = pneg %p150
      // Predicated region
      $region9: #{tpu_custom_call.1} parent=5 // pred_check
        _
      $region10: #{tpu_custom_call.1} parent=5 // pred_check_branch
        %153 = sbr.rel (%p150) target = $region12
      $region11: #{tpu_custom_call.1} parent=5 // pred_region
        %s154 = ssub.s32 %s18, 1
      $region12: #{tpu_custom_call.1} parent=5 // pred_fallthru
        _
      %p155 = scmp.lt.s32.totalorder %s18, 2
      // Predicated region
      $region13: #{tpu_custom_call.1} parent=5 // pred_check
        %p156 = pneg %p155
      $region14: #{tpu_custom_call.1} parent=5 // pred_check_branch
        %158 = sbr.rel (%p156) target = $region16
      $region15: #{tpu_custom_call.1} parent=5 // pred_region
        // Predicated region
        $region17: #{tpu_custom_call.1} parent=15 // pred_check
          %p159 = pneg %p50
        $region18: #{tpu_custom_call.1} parent=15 // pred_check_branch
          %161 = sbr.rel (%p159) target = $region20
        $region19: #{tpu_custom_call.1} parent=15 // pred_region
          %s162 = sand.u32 %s40, 1
          %s163 = scalar_lea.sflag [#allocation3], %s162
          %s164 = sand.u32 %s40, 1
          %s165 = smul.addr %s164, 16
          %s166 = scalar_lea.vmem [#allocation2], %s165
          %s168 = ssub.s32 256, 256
          %169 = vsyncadd %s163, %s168
          %s170 = smul.addr %s25, 4
          %s171 = smul.addr %s170, 64
          %s172 = scalar_lea.hbm %s0, %s171
          %s173 = sshll.u32 %s166, 4
          %s174 = int_to_ptr.vmem [resolvable:$true] %s173
          %179 = dma.hbm_to_vmem [thread:$0]  %s172, 256, %s174, %s163, 128, 128, 8
        $region20: #{tpu_custom_call.1} parent=15 // pred_fallthru
          _
        // Predicated region
        $region21: #{tpu_custom_call.1} parent=15 // pred_check
          %p180 = pneg %p78
        $region22: #{tpu_custom_call.1} parent=15 // pred_check_branch
          %182 = sbr.rel (%p180) target = $region24
        $region23: #{tpu_custom_call.1} parent=15 // pred_region
          %s183 = sand.u32 %s18, 1
          %s184 = scalar_lea.sflag [#allocation6], %s183
          %s185 = sand.u32 %s68, 1
          %s186 = smul.addr %s185, 8
          %s187 = scalar_lea.vmem [#allocation5], %s186
          %s188 = smul.u32 2, %s26
          %s190 = ssub.s32 128, 128
          %191 = vsyncadd %s184, %s190
          %s192 = smul.addr %s25, 2
          %s193 = sadd.s32 %s188, %s192
          %s194 = smul.addr %s193, 64
          %s195 = scalar_lea.hbm %s1, %s194
          %s197 = sshll.u32 %s187, 4
          %s198 = int_to_ptr.vmem [resolvable:$true] %s197
          %200 = dma.hbm_to_vmem [thread:$0]  %s195, 128, %s198, %s184
        $region24: #{tpu_custom_call.1} parent=15 // pred_fallthru
          _
        // Predicated region
        $region25: #{tpu_custom_call.1} parent=15 // pred_check
          %p201 = pneg %p106
        $region26: #{tpu_custom_call.1} parent=15 // pred_check_branch
          %203 = sbr.rel (%p201) target = $region28
        $region27: #{tpu_custom_call.1} parent=15 // pred_region
          %s204 = sand.u32 %s18, 1
          %s205 = scalar_lea.sflag [#allocation6], %s204
          %s206 = sand.u32 %s96, 1
          %s207 = smul.addr %s206, 8
          %s208 = scalar_lea.vmem [#allocation7], %s207
          %s209 = smul.u32 2, %s26
          %s211 = ssub.s32 128, 128
          %212 = vsyncadd %s205, %s211
          %s213 = smul.addr %s25, 2
          %s214 = sadd.s32 %s209, %s213
          %s215 = smul.addr %s214, 64
          %s216 = scalar_lea.hbm %s2, %s215
          %s218 = sshll.u32 %s208, 4
          %s219 = int_to_ptr.vmem [resolvable:$true] %s218
          %221 = dma.hbm_to_vmem [thread:$0]  %s216, 128, %s219, %s205
        $region28: #{tpu_custom_call.1} parent=15 // pred_fallthru
          _
      $region16: #{tpu_custom_call.1} parent=5 // pred_fallthru
        _
      %p222 = scmp.le.s32.totalorder 1, %s18
      %p223 = scmp.lt.s32.totalorder %s18, 3
      %p224 = pnand %p222, %p223
      %p225 = pneg %p224
      // Predicated region
      $region29: #{tpu_custom_call.1} parent=5 // pred_check
        _
      $region30: #{tpu_custom_call.1} parent=5 // pred_check_branch
        %227 = sbr.rel (%p224) target = $region32
      $region31: #{tpu_custom_call.1} parent=5 // pred_region
        %s228 = ssub.s32 %s18, 1
        %s229 = sand.u32 %s43, 1
        %s230 = scalar_lea.sflag [#allocation3], %s229
        %s231 = sand.u32 %s43, 1
        %s232 = smul.addr %s231, 16
        %s233 = scalar_lea.vmem [#allocation2], %s232
        // Predicated region
        $region33: #{tpu_custom_call.1} parent=31 // pred_check
          %p234 = pneg %p56
        $region34: #{tpu_custom_call.1} parent=31 // pred_check_branch
          %236 = sbr.rel (%p234) target = $region36
        $region35: #{tpu_custom_call.1} parent=31 // pred_region
          %237 = dma.done %s230, 256
        $region36: #{tpu_custom_call.1} parent=31 // pred_fallthru
          _
        %s238 = sand.u32 %s23, 1
        %s239 = scalar_lea.sflag [#allocation6], %s238
        %s240 = sand.u32 %s71, 1
        %s241 = smul.addr %s240, 8
        %s242 = scalar_lea.vmem [#allocation5], %s241
        // Predicated region
        $region37: #{tpu_custom_call.1} parent=31 // pred_check
          %p243 = pneg %p84
        $region38: #{tpu_custom_call.1} parent=31 // pred_check_branch
          %245 = sbr.rel (%p243) target = $region40
        $region39: #{tpu_custom_call.1} parent=31 // pred_region
          %246 = dma.done %s239, 128
        $region40: #{tpu_custom_call.1} parent=31 // pred_fallthru
          _
        %s247 = sand.u32 %s23, 1
        %s248 = scalar_lea.sflag [#allocation6], %s247
        %s249 = sand.u32 %s99, 1
        %s250 = smul.addr %s249, 8
        %s251 = scalar_lea.vmem [#allocation7], %s250
        // Predicated region
        $region41: #{tpu_custom_call.1} parent=31 // pred_check
          %p252 = pneg %p112
        $region42: #{tpu_custom_call.1} parent=31 // pred_check_branch
          %254 = sbr.rel (%p252) target = $region44
        $region43: #{tpu_custom_call.1} parent=31 // pred_region
          %255 = dma.done %s248, 128
        $region44: #{tpu_custom_call.1} parent=31 // pred_fallthru
          _
        %s256 = sand.u32 %s43, 1
        %s257 = scalar_lea.sflag [#allocation3], %s256
        %s258 = sand.u32 %s43, 1
        %s259 = smul.addr %s258, 16
        %s260 = scalar_lea.vmem [#allocation2], %s259
        %p261 = pneg %p56
        %p262 = pneg %p53
        %s263 = sand.u32 %s23, 1
        %s264 = scalar_lea.sflag [#allocation6], %s263
        %s265 = sand.u32 %s71, 1
        %s266 = smul.addr %s265, 8
        %s267 = scalar_lea.vmem [#allocation5], %s266
        %p268 = pneg %p84
        %p269 = pneg %p81
        %s270 = sand.u32 %s23, 1
        %s271 = scalar_lea.sflag [#allocation6], %s270
        %s272 = sand.u32 %s99, 1
        %s273 = smul.addr %s272, 8
        %s274 = scalar_lea.vmem [#allocation7], %s273
        %p275 = pneg %p112
        %p276 = pneg %p109
        %p277 = pneg %p140
        %p278 = pneg %p137
        %s279 = sand.u32 %s127, 1
        %s280 = scalar_lea.sflag [#allocation4], %s279
        %s281 = sand.u32 %s127, 1
        %s282 = smul.addr %s281, 32
        %s283 = scalar_lea.vmem [#allocation8], %s282
        %s284 = smul.u32 2, %s28
        %s285 = smul.u32 2, %s28
        %s286 = smul.u32 2, %s28
        %v287 = vld [vmem:[%s233] sm:$0xff]
        %v288 = vld [vmem:[%s233 + $0x8] sm:$0xff]
        %v289 = vld [vmem:[%s242] sm:$0xff]
        %v290 = vld [vmem:[%s251] sm:$0xff]
        %v291 = vlaneseq
        %v292 = vshrl.u32 %v291, 7
        %v293 = vadd.s32 %v292, 8
        %v294 = vadd.s32 %v292, 16
        %v295 = vadd.s32 %v292, 24
        %v296 = vadd.s32 %v292, 32
        %v297 = vadd.s32 %v292, 40
        %v298 = vadd.s32 %v292, 48
        %v299 = vadd.s32 %v292, 56
        %v300 = vadd.s32 %v292, 64
        %v301 = vadd.s32 %v292, 72
        %v302 = vadd.s32 %v292, 80
        %v303 = vadd.s32 %v292, 88
        %v304 = vadd.s32 %v292, 96
        %v305 = vadd.s32 %v292, 104
        %v306 = vadd.s32 %v292, 112
        %v307 = vadd.s32 %v292, 120
        %v308 = vadd.s32 %v292, 128
        %v309 = vadd.s32 %v292, 136
        %v310 = vadd.s32 %v292, 144
        %v311 = vadd.s32 %v292, 152
        %v312 = vadd.s32 %v292, 160
        %v313 = vadd.s32 %v292, 168
        %v314 = vadd.s32 %v292, 176
        %v315 = vadd.s32 %v292, 184
        %v316 = vadd.s32 %v292, 192
        %v317 = vadd.s32 %v292, 200
        %v318 = vadd.s32 %v292, 208
        %v319 = vadd.s32 %v292, 216
        %v320 = vadd.s32 %v292, 224
        %v321 = vadd.s32 %v292, 232
        %v322 = vadd.s32 %v292, 240
        %v323 = vadd.s32 %v292, 248
        %v324 = vlaneseq
        %v325 = vshrl.u32 %v324, 7
        %v326 = vsub.s32 0, %v325
        %v327 = vrot.slane %v289, %v326
        %v328 = vlaneseq
        %v329 = vshrl.u32 %v328, 7
        %v330 = vsub.s32 4, %v329
        %v331 = vrot.slane %v289, %v330
        %v332 = vlaneseq
        %v333 = vshrl.u32 %v332, 7
        %v334 = vsub.s32 0, %v333
        %v335 = vrot.slane %v327, %v334
        %v336 = vlaneseq
        %v337 = vshrl.u32 %v336, 7
        %v338 = vsub.s32 0, %v337
        %v339 = vrot.slane %v331, %v338
        %vm340 = vcmp.eq.s32.totalorder %v292, %v335
        %vm341 = vcmp.eq.s32.totalorder %v292, %v339
        %vm342 = vcmp.eq.s32.totalorder %v293, %v335
        %vm343 = vcmp.eq.s32.totalorder %v293, %v339
        %vm344 = vcmp.eq.s32.totalorder %v294, %v335
        %vm345 = vcmp.eq.s32.totalorder %v294, %v339
        %vm346 = vcmp.eq.s32.totalorder %v295, %v335
        %vm347 = vcmp.eq.s32.totalorder %v295, %v339
        %vm348 = vcmp.eq.s32.totalorder %v296, %v335
        %vm349 = vcmp.eq.s32.totalorder %v296, %v339
        %vm350 = vcmp.eq.s32.totalorder %v297, %v335
        %vm351 = vcmp.eq.s32.totalorder %v297, %v339
        %vm352 = vcmp.eq.s32.totalorder %v298, %v335
        %vm353 = vcmp.eq.s32.totalorder %v298, %v339
        %vm354 = vcmp.eq.s32.totalorder %v299, %v335
        %vm355 = vcmp.eq.s32.totalorder %v299, %v339
        %vm356 = vcmp.eq.s32.totalorder %v300, %v335
        %vm357 = vcmp.eq.s32.totalorder %v300, %v339
        %vm358 = vcmp.eq.s32.totalorder %v301, %v335
        %vm359 = vcmp.eq.s32.totalorder %v301, %v339
        %vm360 = vcmp.eq.s32.totalorder %v302, %v335
        %vm361 = vcmp.eq.s32.totalorder %v302, %v339
        %vm362 = vcmp.eq.s32.totalorder %v303, %v335
        %vm363 = vcmp.eq.s32.totalorder %v303, %v339
        %vm364 = vcmp.eq.s32.totalorder %v304, %v335
        %vm365 = vcmp.eq.s32.totalorder %v304, %v339
        %vm366 = vcmp.eq.s32.totalorder %v305, %v335
        %vm367 = vcmp.eq.s32.totalorder %v305, %v339
        %vm368 = vcmp.eq.s32.totalorder %v306, %v335
        %vm369 = vcmp.eq.s32.totalorder %v306, %v339
        %vm370 = vcmp.eq.s32.totalorder %v307, %v335
        %vm371 = vcmp.eq.s32.totalorder %v307, %v339
        %vm372 = vcmp.eq.s32.totalorder %v308, %v335
        %vm373 = vcmp.eq.s32.totalorder %v308, %v339
        %vm374 = vcmp.eq.s32.totalorder %v309, %v335
        %vm375 = vcmp.eq.s32.totalorder %v309, %v339
        %vm376 = vcmp.eq.s32.totalorder %v310, %v335
        %vm377 = vcmp.eq.s32.totalorder %v310, %v339
        %vm378 = vcmp.eq.s32.totalorder %v311, %v335
        %vm379 = vcmp.eq.s32.totalorder %v311, %v339
        %vm380 = vcmp.eq.s32.totalorder %v312, %v335
        %vm381 = vcmp.eq.s32.totalorder %v312, %v339
        %vm382 = vcmp.eq.s32.totalorder %v313, %v335
        %vm383 = vcmp.eq.s32.totalorder %v313, %v339
        %vm384 = vcmp.eq.s32.totalorder %v314, %v335
        %vm385 = vcmp.eq.s32.totalorder %v314, %v339
        %vm386 = vcmp.eq.s32.totalorder %v315, %v335
        %vm387 = vcmp.eq.s32.totalorder %v315, %v339
        %vm388 = vcmp.eq.s32.totalorder %v316, %v335
        %vm389 = vcmp.eq.s32.totalorder %v316, %v339
        %vm390 = vcmp.eq.s32.totalorder %v317, %v335
        %vm391 = vcmp.eq.s32.totalorder %v317, %v339
        %vm392 = vcmp.eq.s32.totalorder %v318, %v335
        %vm393 = vcmp.eq.s32.totalorder %v318, %v339
        %vm394 = vcmp.eq.s32.totalorder %v319, %v335
        %vm395 = vcmp.eq.s32.totalorder %v319, %v339
        %vm396 = vcmp.eq.s32.totalorder %v320, %v335
        %vm397 = vcmp.eq.s32.totalorder %v320, %v339
        %vm398 = vcmp.eq.s32.totalorder %v321, %v335
        %vm399 = vcmp.eq.s32.totalorder %v321, %v339
        %vm400 = vcmp.eq.s32.totalorder %v322, %v335
        %vm401 = vcmp.eq.s32.totalorder %v322, %v339
        %vm402 = vcmp.eq.s32.totalorder %v323, %v335
        %vm403 = vcmp.eq.s32.totalorder %v323, %v339
        %v405 = vlaneseq
        %v406 = vshrl.u32 %v405, 7
        %v407 = vsub.s32 0, %v406
        %v408 = vrot.slane %v290, %v407
        %v409 = vlaneseq
        %v410 = vshrl.u32 %v409, 7
        %v411 = vsub.s32 4, %v410
        %v412 = vrot.slane %v290, %v411
        %v415 = vlaneseq
        %v416 = vshrl.u32 %v415, 7
        %v417 = vsub.s32 0, %v416
        %v418 = vrot.slane %v408, %v417
        %v419 = vlaneseq
        %v420 = vshrl.u32 %v419, 7
        %v421 = vsub.s32 0, %v420
        %v422 = vrot.slane %v412, %v421
        %v423 = vsel %vm340, %v418, 0.0
        %v424 = vsel %vm341, %v422, 0.0
        %v425 = vsel %vm342, %v418, 0.0
        %v426 = vsel %vm343, %v422, 0.0
        %v427 = vsel %vm344, %v418, 0.0
        %v428 = vsel %vm345, %v422, 0.0
        %v429 = vsel %vm346, %v418, 0.0
        %v430 = vsel %vm347, %v422, 0.0
        %v431 = vsel %vm348, %v418, 0.0
        %v432 = vsel %vm349, %v422, 0.0
        %v433 = vsel %vm350, %v418, 0.0
        %v434 = vsel %vm351, %v422, 0.0
        %v435 = vsel %vm352, %v418, 0.0
        %v436 = vsel %vm353, %v422, 0.0
        %v437 = vsel %vm354, %v418, 0.0
        %v438 = vsel %vm355, %v422, 0.0
        %v439 = vsel %vm356, %v418, 0.0
        %v440 = vsel %vm357, %v422, 0.0
        %v441 = vsel %vm358, %v418, 0.0
        %v442 = vsel %vm359, %v422, 0.0
        %v443 = vsel %vm360, %v418, 0.0
        %v444 = vsel %vm361, %v422, 0.0
        %v445 = vsel %vm362, %v418, 0.0
        %v446 = vsel %vm363, %v422, 0.0
        %v447 = vsel %vm364, %v418, 0.0
        %v448 = vsel %vm365, %v422, 0.0
        %v449 = vsel %vm366, %v418, 0.0
        %v450 = vsel %vm367, %v422, 0.0
        %v451 = vsel %vm368, %v418, 0.0
        %v452 = vsel %vm369, %v422, 0.0
        %v453 = vsel %vm370, %v418, 0.0
        %v454 = vsel %vm371, %v422, 0.0
        %v455 = vsel %vm372, %v418, 0.0
        %v456 = vsel %vm373, %v422, 0.0
        %v457 = vsel %vm374, %v418, 0.0
        %v458 = vsel %vm375, %v422, 0.0
        %v459 = vsel %vm376, %v418, 0.0
        %v460 = vsel %vm377, %v422, 0.0
        %v461 = vsel %vm378, %v418, 0.0
        %v462 = vsel %vm379, %v422, 0.0
        %v463 = vsel %vm380, %v418, 0.0
        %v464 = vsel %vm381, %v422, 0.0
        %v465 = vsel %vm382, %v418, 0.0
        %v466 = vsel %vm383, %v422, 0.0
        %v467 = vsel %vm384, %v418, 0.0
        %v468 = vsel %vm385, %v422, 0.0
        %v469 = vsel %vm386, %v418, 0.0
        %v470 = vsel %vm387, %v422, 0.0
        %v471 = vsel %vm388, %v418, 0.0
        %v472 = vsel %vm389, %v422, 0.0
        %v473 = vsel %vm390, %v418, 0.0
        %v474 = vsel %vm391, %v422, 0.0
        %v475 = vsel %vm392, %v418, 0.0
        %v476 = vsel %vm393, %v422, 0.0
        %v477 = vsel %vm394, %v418, 0.0
        %v478 = vsel %vm395, %v422, 0.0
        %v479 = vsel %vm396, %v418, 0.0
        %v480 = vsel %vm397, %v422, 0.0
        %v481 = vsel %vm398, %v418, 0.0
        %v482 = vsel %vm399, %v422, 0.0
        %v483 = vsel %vm400, %v418, 0.0
        %v484 = vsel %vm401, %v422, 0.0
        %v485 = vsel %vm402, %v418, 0.0
        %v486 = vsel %vm403, %v422, 0.0
        %v487 = vadd.f32 %v423, 0.0
        %v488 = vadd.f32 %v424, 0.0
        %v489 = vadd.f32 %v425, 0.0
        %v490 = vadd.f32 %v426, 0.0
        %v491 = vadd.f32 %v427, 0.0
        %v492 = vadd.f32 %v428, 0.0
        %v493 = vadd.f32 %v429, 0.0
        %v494 = vadd.f32 %v430, 0.0
        %v495 = vadd.f32 %v431, 0.0
        %v496 = vadd.f32 %v432, 0.0
        %v497 = vadd.f32 %v433, 0.0
        %v498 = vadd.f32 %v434, 0.0
        %v499 = vadd.f32 %v435, 0.0
        %v500 = vadd.f32 %v436, 0.0
        %v501 = vadd.f32 %v437, 0.0
        %v502 = vadd.f32 %v438, 0.0
        %v503 = vadd.f32 %v439, 0.0
        %v504 = vadd.f32 %v440, 0.0
        %v505 = vadd.f32 %v441, 0.0
        %v506 = vadd.f32 %v442, 0.0
        %v507 = vadd.f32 %v443, 0.0
        %v508 = vadd.f32 %v444, 0.0
        %v509 = vadd.f32 %v445, 0.0
        %v510 = vadd.f32 %v446, 0.0
        %v511 = vadd.f32 %v447, 0.0
        %v512 = vadd.f32 %v448, 0.0
        %v513 = vadd.f32 %v449, 0.0
        %v514 = vadd.f32 %v450, 0.0
        %v515 = vadd.f32 %v451, 0.0
        %v516 = vadd.f32 %v452, 0.0
        %v517 = vadd.f32 %v453, 0.0
        %v518 = vadd.f32 %v454, 0.0
        %v519 = vadd.f32 %v455, 0.0
        %v520 = vadd.f32 %v456, 0.0
        %v521 = vadd.f32 %v457, 0.0
        %v522 = vadd.f32 %v458, 0.0
        %v523 = vadd.f32 %v459, 0.0
        %v524 = vadd.f32 %v460, 0.0
        %v525 = vadd.f32 %v461, 0.0
        %v526 = vadd.f32 %v462, 0.0
        %v527 = vadd.f32 %v463, 0.0
        %v528 = vadd.f32 %v464, 0.0
        %v529 = vadd.f32 %v465, 0.0
        %v530 = vadd.f32 %v466, 0.0
        %v531 = vadd.f32 %v467, 0.0
        %v532 = vadd.f32 %v468, 0.0
        %v533 = vadd.f32 %v469, 0.0
        %v534 = vadd.f32 %v470, 0.0
        %v535 = vadd.f32 %v471, 0.0
        %v536 = vadd.f32 %v472, 0.0
        %v537 = vadd.f32 %v473, 0.0
        %v538 = vadd.f32 %v474, 0.0
        %v539 = vadd.f32 %v475, 0.0
        %v540 = vadd.f32 %v476, 0.0
        %v541 = vadd.f32 %v477, 0.0
        %v542 = vadd.f32 %v478, 0.0
        %v543 = vadd.f32 %v479, 0.0
        %v544 = vadd.f32 %v480, 0.0
        %v545 = vadd.f32 %v481, 0.0
        %v546 = vadd.f32 %v482, 0.0
        %v547 = vadd.f32 %v483, 0.0
        %v548 = vadd.f32 %v484, 0.0
        %v549 = vadd.f32 %v485, 0.0
        %v550 = vadd.f32 %v486, 0.0
        %v551 = vlaneseq
        %v552 = vshrl.u32 %v551, 7
        %v553 = vsub.s32 1, %v552
        %v554 = vrot.slane %v289, %v553
        %v555 = vlaneseq
        %v556 = vshrl.u32 %v555, 7
        %v557 = vsub.s32 5, %v556
        %v558 = vrot.slane %v289, %v557
        %v559 = vlaneseq
        %v560 = vshrl.u32 %v559, 7
        %v561 = vsub.s32 1, %v560
        %v562 = vrot.slane %v554, %v561
        %v563 = vlaneseq
        %v564 = vshrl.u32 %v563, 7
        %v565 = vsub.s32 1, %v564
        %v566 = vrot.slane %v558, %v565
        %vm567 = vcmp.eq.s32.totalorder %v292, %v562
        %vm568 = vcmp.eq.s32.totalorder %v292, %v566
        %vm569 = vcmp.eq.s32.totalorder %v293, %v562
        %vm570 = vcmp.eq.s32.totalorder %v293, %v566
        %vm571 = vcmp.eq.s32.totalorder %v294, %v562
        %vm572 = vcmp.eq.s32.totalorder %v294, %v566
        %vm573 = vcmp.eq.s32.totalorder %v295, %v562
        %vm574 = vcmp.eq.s32.totalorder %v295, %v566
        %vm575 = vcmp.eq.s32.totalorder %v296, %v562
        %vm576 = vcmp.eq.s32.totalorder %v296, %v566
        %vm577 = vcmp.eq.s32.totalorder %v297, %v562
        %vm578 = vcmp.eq.s32.totalorder %v297, %v566
        %vm579 = vcmp.eq.s32.totalorder %v298, %v562
        %vm580 = vcmp.eq.s32.totalorder %v298, %v566
        %vm581 = vcmp.eq.s32.totalorder %v299, %v562
        %vm582 = vcmp.eq.s32.totalorder %v299, %v566
        %vm583 = vcmp.eq.s32.totalorder %v300, %v562
        %vm584 = vcmp.eq.s32.totalorder %v300, %v566
        %vm585 = vcmp.eq.s32.totalorder %v301, %v562
        %vm586 = vcmp.eq.s32.totalorder %v301, %v566
        %vm587 = vcmp.eq.s32.totalorder %v302, %v562
        %vm588 = vcmp.eq.s32.totalorder %v302, %v566
        %vm589 = vcmp.eq.s32.totalorder %v303, %v562
        %vm590 = vcmp.eq.s32.totalorder %v303, %v566
        %vm591 = vcmp.eq.s32.totalorder %v304, %v562
        %vm592 = vcmp.eq.s32.totalorder %v304, %v566
        %vm593 = vcmp.eq.s32.totalorder %v305, %v562
        %vm594 = vcmp.eq.s32.totalorder %v305, %v566
        %vm595 = vcmp.eq.s32.totalorder %v306, %v562
        %vm596 = vcmp.eq.s32.totalorder %v306, %v566
        %vm597 = vcmp.eq.s32.totalorder %v307, %v562
        %vm598 = vcmp.eq.s32.totalorder %v307, %v566
        %vm599 = vcmp.eq.s32.totalorder %v308, %v562
        %vm600 = vcmp.eq.s32.totalorder %v308, %v566
        %vm601 = vcmp.eq.s32.totalorder %v309, %v562
        %vm602 = vcmp.eq.s32.totalorder %v309, %v566
        %vm603 = vcmp.eq.s32.totalorder %v310, %v562
        %vm604 = vcmp.eq.s32.totalorder %v310, %v566
        %vm605 = vcmp.eq.s32.totalorder %v311, %v562
        %vm606 = vcmp.eq.s32.totalorder %v311, %v566
        %vm607 = vcmp.eq.s32.totalorder %v312, %v562
        %vm608 = vcmp.eq.s32.totalorder %v312, %v566
        %vm609 = vcmp.eq.s32.totalorder %v313, %v562
        %vm610 = vcmp.eq.s32.totalorder %v313, %v566
        %vm611 = vcmp.eq.s32.totalorder %v314, %v562
        %vm612 = vcmp.eq.s32.totalorder %v314, %v566
        %vm613 = vcmp.eq.s32.totalorder %v315, %v562
        %vm614 = vcmp.eq.s32.totalorder %v315, %v566
        %vm615 = vcmp.eq.s32.totalorder %v316, %v562
        %vm616 = vcmp.eq.s32.totalorder %v316, %v566
        %vm617 = vcmp.eq.s32.totalorder %v317, %v562
        %vm618 = vcmp.eq.s32.totalorder %v317, %v566
        %vm619 = vcmp.eq.s32.totalorder %v318, %v562
        %vm620 = vcmp.eq.s32.totalorder %v318, %v566
        %vm621 = vcmp.eq.s32.totalorder %v319, %v562
        %vm622 = vcmp.eq.s32.totalorder %v319, %v566
        %vm623 = vcmp.eq.s32.totalorder %v320, %v562
        %vm624 = vcmp.eq.s32.totalorder %v320, %v566
        %vm625 = vcmp.eq.s32.totalorder %v321, %v562
        %vm626 = vcmp.eq.s32.totalorder %v321, %v566
        %vm627 = vcmp.eq.s32.totalorder %v322, %v562
        %vm628 = vcmp.eq.s32.totalorder %v322, %v566
        %vm629 = vcmp.eq.s32.totalorder %v323, %v562
        %vm630 = vcmp.eq.s32.totalorder %v323, %v566
        %v631 = vlaneseq
        %v632 = vshrl.u32 %v631, 7
        %v633 = vsub.s32 1, %v632
        %v634 = vrot.slane %v290, %v633
        %v635 = vlaneseq
        %v636 = vshrl.u32 %v635, 7
        %v637 = vsub.s32 5, %v636
        %v638 = vrot.slane %v290, %v637
        %v641 = vlaneseq
        %v642 = vshrl.u32 %v641, 7
        %v643 = vsub.s32 1, %v642
        %v644 = vrot.slane %v634, %v643
        %v645 = vlaneseq
        %v646 = vshrl.u32 %v645, 7
        %v647 = vsub.s32 1, %v646
        %v648 = vrot.slane %v638, %v647
        %v649 = vsel %vm567, %v644, 0.0
        %v650 = vsel %vm568, %v648, 0.0
        %v651 = vsel %vm569, %v644, 0.0
        %v652 = vsel %vm570, %v648, 0.0
        %v653 = vsel %vm571, %v644, 0.0
        %v654 = vsel %vm572, %v648, 0.0
        %v655 = vsel %vm573, %v644, 0.0
        %v656 = vsel %vm574, %v648, 0.0
        %v657 = vsel %vm575, %v644, 0.0
        %v658 = vsel %vm576, %v648, 0.0
        %v659 = vsel %vm577, %v644, 0.0
        %v660 = vsel %vm578, %v648, 0.0
        %v661 = vsel %vm579, %v644, 0.0
        %v662 = vsel %vm580, %v648, 0.0
        %v663 = vsel %vm581, %v644, 0.0
        %v664 = vsel %vm582, %v648, 0.0
        %v665 = vsel %vm583, %v644, 0.0
        %v666 = vsel %vm584, %v648, 0.0
        %v667 = vsel %vm585, %v644, 0.0
        %v668 = vsel %vm586, %v648, 0.0
        %v669 = vsel %vm587, %v644, 0.0
        %v670 = vsel %vm588, %v648, 0.0
        %v671 = vsel %vm589, %v644, 0.0
        %v672 = vsel %vm590, %v648, 0.0
        %v673 = vsel %vm591, %v644, 0.0
        %v674 = vsel %vm592, %v648, 0.0
        %v675 = vsel %vm593, %v644, 0.0
        %v676 = vsel %vm594, %v648, 0.0
        %v677 = vsel %vm595, %v644, 0.0
        %v678 = vsel %vm596, %v648, 0.0
        %v679 = vsel %vm597, %v644, 0.0
        %v680 = vsel %vm598, %v648, 0.0
        %v681 = vsel %vm599, %v644, 0.0
        %v682 = vsel %vm600, %v648, 0.0
        %v683 = vsel %vm601, %v644, 0.0
        %v684 = vsel %vm602, %v648, 0.0
        %v685 = vsel %vm603, %v644, 0.0
        %v686 = vsel %vm604, %v648, 0.0
        %v687 = vsel %vm605, %v644, 0.0
        %v688 = vsel %vm606, %v648, 0.0
        %v689 = vsel %vm607, %v644, 0.0
        %v690 = vsel %vm608, %v648, 0.0
        %v691 = vsel %vm609, %v644, 0.0
        %v692 = vsel %vm610, %v648, 0.0
        %v693 = vsel %vm611, %v644, 0.0
        %v694 = vsel %vm612, %v648, 0.0
        %v695 = vsel %vm613, %v644, 0.0
        %v696 = vsel %vm614, %v648, 0.0
        %v697 = vsel %vm615, %v644, 0.0
        %v698 = vsel %vm616, %v648, 0.0
        %v699 = vsel %vm617, %v644, 0.0
        %v700 = vsel %vm618, %v648, 0.0
        %v701 = vsel %vm619, %v644, 0.0
        %v702 = vsel %vm620, %v648, 0.0
        %v703 = vsel %vm621, %v644, 0.0
        %v704 = vsel %vm622, %v648, 0.0
        %v705 = vsel %vm623, %v644, 0.0
        %v706 = vsel %vm624, %v648, 0.0
        %v707 = vsel %vm625, %v644, 0.0
        %v708 = vsel %vm626, %v648, 0.0
        %v709 = vsel %vm627, %v644, 0.0
        %v710 = vsel %vm628, %v648, 0.0
        %v711 = vsel %vm629, %v644, 0.0
        %v712 = vsel %vm630, %v648, 0.0
        %v713 = vadd.f32 %v487, %v649
        %v714 = vadd.f32 %v488, %v650
        %v715 = vadd.f32 %v489, %v651
        %v716 = vadd.f32 %v490, %v652
        %v717 = vadd.f32 %v491, %v653
        %v718 = vadd.f32 %v492, %v654
        %v719 = vadd.f32 %v493, %v655
        %v720 = vadd.f32 %v494, %v656
        %v721 = vadd.f32 %v495, %v657
        %v722 = vadd.f32 %v496, %v658
        %v723 = vadd.f32 %v497, %v659
        %v724 = vadd.f32 %v498, %v660
        %v725 = vadd.f32 %v499, %v661
        %v726 = vadd.f32 %v500, %v662
        %v727 = vadd.f32 %v501, %v663
        %v728 = vadd.f32 %v502, %v664
        %v729 = vadd.f32 %v503, %v665
        %v730 = vadd.f32 %v504, %v666
        %v731 = vadd.f32 %v505, %v667
        %v732 = vadd.f32 %v506, %v668
        %v733 = vadd.f32 %v507, %v669
        %v734 = vadd.f32 %v508, %v670
        %v735 = vadd.f32 %v509, %v671
        %v736 = vadd.f32 %v510, %v672
        %v737 = vadd.f32 %v511, %v673
        %v738 = vadd.f32 %v512, %v674
        %v739 = vadd.f32 %v513, %v675
        %v740 = vadd.f32 %v514, %v676
        %v741 = vadd.f32 %v515, %v677
        %v742 = vadd.f32 %v516, %v678
        %v743 = vadd.f32 %v517, %v679
        %v744 = vadd.f32 %v518, %v680
        %v745 = vadd.f32 %v519, %v681
        %v746 = vadd.f32 %v520, %v682
        %v747 = vadd.f32 %v521, %v683
        %v748 = vadd.f32 %v522, %v684
        %v749 = vadd.f32 %v523, %v685
        %v750 = vadd.f32 %v524, %v686
        %v751 = vadd.f32 %v525, %v687
        %v752 = vadd.f32 %v526, %v688
        %v753 = vadd.f32 %v527, %v689
        %v754 = vadd.f32 %v528, %v690
        %v755 = vadd.f32 %v529, %v691
        %v756 = vadd.f32 %v530, %v692
        %v757 = vadd.f32 %v531, %v693
        %v758 = vadd.f32 %v532, %v694
        %v759 = vadd.f32 %v533, %v695
        %v760 = vadd.f32 %v534, %v696
        %v761 = vadd.f32 %v535, %v697
        %v762 = vadd.f32 %v536, %v698
        %v763 = vadd.f32 %v537, %v699
        %v764 = vadd.f32 %v538, %v700
        %v765 = vadd.f32 %v539, %v701
        %v766 = vadd.f32 %v540, %v702
        %v767 = vadd.f32 %v541, %v703
        %v768 = vadd.f32 %v542, %v704
        %v769 = vadd.f32 %v543, %v705
        %v770 = vadd.f32 %v544, %v706
        %v771 = vadd.f32 %v545, %v707
        %v772 = vadd.f32 %v546, %v708
        %v773 = vadd.f32 %v547, %v709
        %v774 = vadd.f32 %v548, %v710
        %v775 = vadd.f32 %v549, %v711
        %v776 = vadd.f32 %v550, %v712
        %v777 = vlaneseq
        %v778 = vshrl.u32 %v777, 7
        %v779 = vsub.s32 2, %v778
        %v780 = vrot.slane %v289, %v779
        %v781 = vlaneseq
        %v782 = vshrl.u32 %v781, 7
        %v783 = vsub.s32 6, %v782
        %v784 = vrot.slane %v289, %v783
        %v785 = vlaneseq
        %v786 = vshrl.u32 %v785, 7
        %v787 = vsub.s32 2, %v786
        %v788 = vrot.slane %v780, %v787
        %v789 = vlaneseq
        %v790 = vshrl.u32 %v789, 7
        %v791 = vsub.s32 2, %v790
        %v792 = vrot.slane %v784, %v791
        %vm793 = vcmp.eq.s32.totalorder %v292, %v788
        %vm794 = vcmp.eq.s32.totalorder %v292, %v792
        %vm795 = vcmp.eq.s32.totalorder %v293, %v788
        %vm796 = vcmp.eq.s32.totalorder %v293, %v792
        %vm797 = vcmp.eq.s32.totalorder %v294, %v788
        %vm798 = vcmp.eq.s32.totalorder %v294, %v792
        %vm799 = vcmp.eq.s32.totalorder %v295, %v788
        %vm800 = vcmp.eq.s32.totalorder %v295, %v792
        %vm801 = vcmp.eq.s32.totalorder %v296, %v788
        %vm802 = vcmp.eq.s32.totalorder %v296, %v792
        %vm803 = vcmp.eq.s32.totalorder %v297, %v788
        %vm804 = vcmp.eq.s32.totalorder %v297, %v792
        %vm805 = vcmp.eq.s32.totalorder %v298, %v788
        %vm806 = vcmp.eq.s32.totalorder %v298, %v792
        %vm807 = vcmp.eq.s32.totalorder %v299, %v788
        %vm808 = vcmp.eq.s32.totalorder %v299, %v792
        %vm809 = vcmp.eq.s32.totalorder %v300, %v788
        %vm810 = vcmp.eq.s32.totalorder %v300, %v792
        %vm811 = vcmp.eq.s32.totalorder %v301, %v788
        %vm812 = vcmp.eq.s32.totalorder %v301, %v792
        %vm813 = vcmp.eq.s32.totalorder %v302, %v788
        %vm814 = vcmp.eq.s32.totalorder %v302, %v792
        %vm815 = vcmp.eq.s32.totalorder %v303, %v788
        %vm816 = vcmp.eq.s32.totalorder %v303, %v792
        %vm817 = vcmp.eq.s32.totalorder %v304, %v788
        %vm818 = vcmp.eq.s32.totalorder %v304, %v792
        %vm819 = vcmp.eq.s32.totalorder %v305, %v788
        %vm820 = vcmp.eq.s32.totalorder %v305, %v792
        %vm821 = vcmp.eq.s32.totalorder %v306, %v788
        %vm822 = vcmp.eq.s32.totalorder %v306, %v792
        %vm823 = vcmp.eq.s32.totalorder %v307, %v788
        %vm824 = vcmp.eq.s32.totalorder %v307, %v792
        %vm825 = vcmp.eq.s32.totalorder %v308, %v788
        %vm826 = vcmp.eq.s32.totalorder %v308, %v792
        %vm827 = vcmp.eq.s32.totalorder %v309, %v788
        %vm828 = vcmp.eq.s32.totalorder %v309, %v792
        %vm829 = vcmp.eq.s32.totalorder %v310, %v788
        %vm830 = vcmp.eq.s32.totalorder %v310, %v792
        %vm831 = vcmp.eq.s32.totalorder %v311, %v788
        %vm832 = vcmp.eq.s32.totalorder %v311, %v792
        %vm833 = vcmp.eq.s32.totalorder %v312, %v788
        %vm834 = vcmp.eq.s32.totalorder %v312, %v792
        %vm835 = vcmp.eq.s32.totalorder %v313, %v788
        %vm836 = vcmp.eq.s32.totalorder %v313, %v792
        %vm837 = vcmp.eq.s32.totalorder %v314, %v788
        %vm838 = vcmp.eq.s32.totalorder %v314, %v792
        %vm839 = vcmp.eq.s32.totalorder %v315, %v788
        %vm840 = vcmp.eq.s32.totalorder %v315, %v792
        %vm841 = vcmp.eq.s32.totalorder %v316, %v788
        %vm842 = vcmp.eq.s32.totalorder %v316, %v792
        %vm843 = vcmp.eq.s32.totalorder %v317, %v788
        %vm844 = vcmp.eq.s32.totalorder %v317, %v792
        %vm845 = vcmp.eq.s32.totalorder %v318, %v788
        %vm846 = vcmp.eq.s32.totalorder %v318, %v792
        %vm847 = vcmp.eq.s32.totalorder %v319, %v788
        %vm848 = vcmp.eq.s32.totalorder %v319, %v792
        %vm849 = vcmp.eq.s32.totalorder %v320, %v788
        %vm850 = vcmp.eq.s32.totalorder %v320, %v792
        %vm851 = vcmp.eq.s32.totalorder %v321, %v788
        %vm852 = vcmp.eq.s32.totalorder %v321, %v792
        %vm853 = vcmp.eq.s32.totalorder %v322, %v788
        %vm854 = vcmp.eq.s32.totalorder %v322, %v792
        %vm855 = vcmp.eq.s32.totalorder %v323, %v788
        %vm856 = vcmp.eq.s32.totalorder %v323, %v792
        %v857 = vlaneseq
        %v858 = vshrl.u32 %v857, 7
        %v859 = vsub.s32 2, %v858
        %v860 = vrot.slane %v290, %v859
        %v861 = vlaneseq
        %v862 = vshrl.u32 %v861, 7
        %v863 = vsub.s32 6, %v862
        %v864 = vrot.slane %v290, %v863
        %v867 = vlaneseq
        %v868 = vshrl.u32 %v867, 7
        %v869 = vsub.s32 2, %v868
        %v870 = vrot.slane %v860, %v869
        %v871 = vlaneseq
        %v872 = vshrl.u32 %v871, 7
        %v873 = vsub.s32 2, %v872
        %v874 = vrot.slane %v864, %v873
        %v875 = vsel %vm793, %v870, 0.0
        %v876 = vsel %vm794, %v874, 0.0
        %v877 = vsel %vm795, %v870, 0.0
        %v878 = vsel %vm796, %v874, 0.0
        %v879 = vsel %vm797, %v870, 0.0
        %v880 = vsel %vm798, %v874, 0.0
        %v881 = vsel %vm799, %v870, 0.0
        %v882 = vsel %vm800, %v874, 0.0
        %v883 = vsel %vm801, %v870, 0.0
        %v884 = vsel %vm802, %v874, 0.0
        %v885 = vsel %vm803, %v870, 0.0
        %v886 = vsel %vm804, %v874, 0.0
        %v887 = vsel %vm805, %v870, 0.0
        %v888 = vsel %vm806, %v874, 0.0
        %v889 = vsel %vm807, %v870, 0.0
        %v890 = vsel %vm808, %v874, 0.0
        %v891 = vsel %vm809, %v870, 0.0
        %v892 = vsel %vm810, %v874, 0.0
        %v893 = vsel %vm811, %v870, 0.0
        %v894 = vsel %vm812, %v874, 0.0
        %v895 = vsel %vm813, %v870, 0.0
        %v896 = vsel %vm814, %v874, 0.0
        %v897 = vsel %vm815, %v870, 0.0
        %v898 = vsel %vm816, %v874, 0.0
        %v899 = vsel %vm817, %v870, 0.0
        %v900 = vsel %vm818, %v874, 0.0
        %v901 = vsel %vm819, %v870, 0.0
        %v902 = vsel %vm820, %v874, 0.0
        %v903 = vsel %vm821, %v870, 0.0
        %v904 = vsel %vm822, %v874, 0.0
        %v905 = vsel %vm823, %v870, 0.0
        %v906 = vsel %vm824, %v874, 0.0
        %v907 = vsel %vm825, %v870, 0.0
        %v908 = vsel %vm826, %v874, 0.0
        %v909 = vsel %vm827, %v870, 0.0
        %v910 = vsel %vm828, %v874, 0.0
        %v911 = vsel %vm829, %v870, 0.0
        %v912 = vsel %vm830, %v874, 0.0
        %v913 = vsel %vm831, %v870, 0.0
        %v914 = vsel %vm832, %v874, 0.0
        %v915 = vsel %vm833, %v870, 0.0
        %v916 = vsel %vm834, %v874, 0.0
        %v917 = vsel %vm835, %v870, 0.0
        %v918 = vsel %vm836, %v874, 0.0
        %v919 = vsel %vm837, %v870, 0.0
        %v920 = vsel %vm838, %v874, 0.0
        %v921 = vsel %vm839, %v870, 0.0
        %v922 = vsel %vm840, %v874, 0.0
        %v923 = vsel %vm841, %v870, 0.0
        %v924 = vsel %vm842, %v874, 0.0
        %v925 = vsel %vm843, %v870, 0.0
        %v926 = vsel %vm844, %v874, 0.0
        %v927 = vsel %vm845, %v870, 0.0
        %v928 = vsel %vm846, %v874, 0.0
        %v929 = vsel %vm847, %v870, 0.0
        %v930 = vsel %vm848, %v874, 0.0
        %v931 = vsel %vm849, %v870, 0.0
        %v932 = vsel %vm850, %v874, 0.0
        %v933 = vsel %vm851, %v870, 0.0
        %v934 = vsel %vm852, %v874, 0.0
        %v935 = vsel %vm853, %v870, 0.0
        %v936 = vsel %vm854, %v874, 0.0
        %v937 = vsel %vm855, %v870, 0.0
        %v938 = vsel %vm856, %v874, 0.0
        %v939 = vadd.f32 %v713, %v875
        %v940 = vadd.f32 %v714, %v876
        %v941 = vadd.f32 %v715, %v877
        %v942 = vadd.f32 %v716, %v878
        %v943 = vadd.f32 %v717, %v879
        %v944 = vadd.f32 %v718, %v880
        %v945 = vadd.f32 %v719, %v881
        %v946 = vadd.f32 %v720, %v882
        %v947 = vadd.f32 %v721, %v883
        %v948 = vadd.f32 %v722, %v884
        %v949 = vadd.f32 %v723, %v885
        %v950 = vadd.f32 %v724, %v886
        %v951 = vadd.f32 %v725, %v887
        %v952 = vadd.f32 %v726, %v888
        %v953 = vadd.f32 %v727, %v889
        %v954 = vadd.f32 %v728, %v890
        %v955 = vadd.f32 %v729, %v891
        %v956 = vadd.f32 %v730, %v892
        %v957 = vadd.f32 %v731, %v893
        %v958 = vadd.f32 %v732, %v894
        %v959 = vadd.f32 %v733, %v895
        %v960 = vadd.f32 %v734, %v896
        %v961 = vadd.f32 %v735, %v897
        %v962 = vadd.f32 %v736, %v898
        %v963 = vadd.f32 %v737, %v899
        %v964 = vadd.f32 %v738, %v900
        %v965 = vadd.f32 %v739, %v901
        %v966 = vadd.f32 %v740, %v902
        %v967 = vadd.f32 %v741, %v903
        %v968 = vadd.f32 %v742, %v904
        %v969 = vadd.f32 %v743, %v905
        %v970 = vadd.f32 %v744, %v906
        %v971 = vadd.f32 %v745, %v907
        %v972 = vadd.f32 %v746, %v908
        %v973 = vadd.f32 %v747, %v909
        %v974 = vadd.f32 %v748, %v910
        %v975 = vadd.f32 %v749, %v911
        %v976 = vadd.f32 %v750, %v912
        %v977 = vadd.f32 %v751, %v913
        %v978 = vadd.f32 %v752, %v914
        %v979 = vadd.f32 %v753, %v915
        %v980 = vadd.f32 %v754, %v916
        %v981 = vadd.f32 %v755, %v917
        %v982 = vadd.f32 %v756, %v918
        %v983 = vadd.f32 %v757, %v919
        %v984 = vadd.f32 %v758, %v920
        %v985 = vadd.f32 %v759, %v921
        %v986 = vadd.f32 %v760, %v922
        %v987 = vadd.f32 %v761, %v923
        %v988 = vadd.f32 %v762, %v924
        %v989 = vadd.f32 %v763, %v925
        %v990 = vadd.f32 %v764, %v926
        %v991 = vadd.f32 %v765, %v927
        %v992 = vadd.f32 %v766, %v928
        %v993 = vadd.f32 %v767, %v929
        %v994 = vadd.f32 %v768, %v930
        %v995 = vadd.f32 %v769, %v931
        %v996 = vadd.f32 %v770, %v932
        %v997 = vadd.f32 %v771, %v933
        %v998 = vadd.f32 %v772, %v934
        %v999 = vadd.f32 %v773, %v935
        %v1000 = vadd.f32 %v774, %v936
        %v1001 = vadd.f32 %v775, %v937
        %v1002 = vadd.f32 %v776, %v938
        %v1003 = vlaneseq
        %v1004 = vshrl.u32 %v1003, 7
        %v1005 = vsub.s32 3, %v1004
        %v1006 = vrot.slane %v289, %v1005
        %v1007 = vlaneseq
        %v1008 = vshrl.u32 %v1007, 7
        %v1009 = vsub.s32 7, %v1008
        %v1010 = vrot.slane %v289, %v1009
        %v1011 = vlaneseq
        %v1012 = vshrl.u32 %v1011, 7
        %v1013 = vsub.s32 3, %v1012
        %v1014 = vrot.slane %v1006, %v1013
        %v1015 = vlaneseq
        %v1016 = vshrl.u32 %v1015, 7
        %v1017 = vsub.s32 3, %v1016
        %v1018 = vrot.slane %v1010, %v1017
        %vm1019 = vcmp.eq.s32.totalorder %v292, %v1014
        %vm1020 = vcmp.eq.s32.totalorder %v292, %v1018
        %vm1021 = vcmp.eq.s32.totalorder %v293, %v1014
        %vm1022 = vcmp.eq.s32.totalorder %v293, %v1018
        %vm1023 = vcmp.eq.s32.totalorder %v294, %v1014
        %vm1024 = vcmp.eq.s32.totalorder %v294, %v1018
        %vm1025 = vcmp.eq.s32.totalorder %v295, %v1014
        %vm1026 = vcmp.eq.s32.totalorder %v295, %v1018
        %vm1027 = vcmp.eq.s32.totalorder %v296, %v1014
        %vm1028 = vcmp.eq.s32.totalorder %v296, %v1018
        %vm1029 = vcmp.eq.s32.totalorder %v297, %v1014
        %vm1030 = vcmp.eq.s32.totalorder %v297, %v1018
        %vm1031 = vcmp.eq.s32.totalorder %v298, %v1014
        %vm1032 = vcmp.eq.s32.totalorder %v298, %v1018
        %vm1033 = vcmp.eq.s32.totalorder %v299, %v1014
        %vm1034 = vcmp.eq.s32.totalorder %v299, %v1018
        %vm1035 = vcmp.eq.s32.totalorder %v300, %v1014
        %vm1036 = vcmp.eq.s32.totalorder %v300, %v1018
        %vm1037 = vcmp.eq.s32.totalorder %v301, %v1014
        %vm1038 = vcmp.eq.s32.totalorder %v301, %v1018
        %vm1039 = vcmp.eq.s32.totalorder %v302, %v1014
        %vm1040 = vcmp.eq.s32.totalorder %v302, %v1018
        %vm1041 = vcmp.eq.s32.totalorder %v303, %v1014
        %vm1042 = vcmp.eq.s32.totalorder %v303, %v1018
        %vm1043 = vcmp.eq.s32.totalorder %v304, %v1014
        %vm1044 = vcmp.eq.s32.totalorder %v304, %v1018
        %vm1045 = vcmp.eq.s32.totalorder %v305, %v1014
        %vm1046 = vcmp.eq.s32.totalorder %v305, %v1018
        %vm1047 = vcmp.eq.s32.totalorder %v306, %v1014
        %vm1048 = vcmp.eq.s32.totalorder %v306, %v1018
        %vm1049 = vcmp.eq.s32.totalorder %v307, %v1014
        %vm1050 = vcmp.eq.s32.totalorder %v307, %v1018
        %vm1051 = vcmp.eq.s32.totalorder %v308, %v1014
        %vm1052 = vcmp.eq.s32.totalorder %v308, %v1018
        %vm1053 = vcmp.eq.s32.totalorder %v309, %v1014
        %vm1054 = vcmp.eq.s32.totalorder %v309, %v1018
        %vm1055 = vcmp.eq.s32.totalorder %v310, %v1014
        %vm1056 = vcmp.eq.s32.totalorder %v310, %v1018
        %vm1057 = vcmp.eq.s32.totalorder %v311, %v1014
        %vm1058 = vcmp.eq.s32.totalorder %v311, %v1018
        %vm1059 = vcmp.eq.s32.totalorder %v312, %v1014
        %vm1060 = vcmp.eq.s32.totalorder %v312, %v1018
        %vm1061 = vcmp.eq.s32.totalorder %v313, %v1014
        %vm1062 = vcmp.eq.s32.totalorder %v313, %v1018
        %vm1063 = vcmp.eq.s32.totalorder %v314, %v1014
        %vm1064 = vcmp.eq.s32.totalorder %v314, %v1018
        %vm1065 = vcmp.eq.s32.totalorder %v315, %v1014
        %vm1066 = vcmp.eq.s32.totalorder %v315, %v1018
        %vm1067 = vcmp.eq.s32.totalorder %v316, %v1014
        %vm1068 = vcmp.eq.s32.totalorder %v316, %v1018
        %vm1069 = vcmp.eq.s32.totalorder %v317, %v1014
        %vm1070 = vcmp.eq.s32.totalorder %v317, %v1018
        %vm1071 = vcmp.eq.s32.totalorder %v318, %v1014
        %vm1072 = vcmp.eq.s32.totalorder %v318, %v1018
        %vm1073 = vcmp.eq.s32.totalorder %v319, %v1014
        %vm1074 = vcmp.eq.s32.totalorder %v319, %v1018
        %vm1075 = vcmp.eq.s32.totalorder %v320, %v1014
        %vm1076 = vcmp.eq.s32.totalorder %v320, %v1018
        %vm1077 = vcmp.eq.s32.totalorder %v321, %v1014
        %vm1078 = vcmp.eq.s32.totalorder %v321, %v1018
        %vm1079 = vcmp.eq.s32.totalorder %v322, %v1014
        %vm1080 = vcmp.eq.s32.totalorder %v322, %v1018
        %vm1081 = vcmp.eq.s32.totalorder %v323, %v1014
        %vm1082 = vcmp.eq.s32.totalorder %v323, %v1018
        %v1083 = vlaneseq
        %v1084 = vshrl.u32 %v1083, 7
        %v1085 = vsub.s32 3, %v1084
        %v1086 = vrot.slane %v290, %v1085
        %v1087 = vlaneseq
        %v1088 = vshrl.u32 %v1087, 7
        %v1089 = vsub.s32 7, %v1088
        %v1090 = vrot.slane %v290, %v1089
        %v1093 = vlaneseq
        %v1094 = vshrl.u32 %v1093, 7
        %v1095 = vsub.s32 3, %v1094
        %v1096 = vrot.slane %v1086, %v1095
        %v1097 = vlaneseq
        %v1098 = vshrl.u32 %v1097, 7
        %v1099 = vsub.s32 3, %v1098
        %v1100 = vrot.slane %v1090, %v1099
        %v1101 = vsel %vm1019, %v1096, 0.0
        %v1102 = vsel %vm1020, %v1100, 0.0
        %v1103 = vsel %vm1021, %v1096, 0.0
        %v1104 = vsel %vm1022, %v1100, 0.0
        %v1105 = vsel %vm1023, %v1096, 0.0
        %v1106 = vsel %vm1024, %v1100, 0.0
        %v1107 = vsel %vm1025, %v1096, 0.0
        %v1108 = vsel %vm1026, %v1100, 0.0
        %v1109 = vsel %vm1027, %v1096, 0.0
        %v1110 = vsel %vm1028, %v1100, 0.0
        %v1111 = vsel %vm1029, %v1096, 0.0
        %v1112 = vsel %vm1030, %v1100, 0.0
        %v1113 = vsel %vm1031, %v1096, 0.0
        %v1114 = vsel %vm1032, %v1100, 0.0
        %v1115 = vsel %vm1033, %v1096, 0.0
        %v1116 = vsel %vm1034, %v1100, 0.0
        %v1117 = vsel %vm1035, %v1096, 0.0
        %v1118 = vsel %vm1036, %v1100, 0.0
        %v1119 = vsel %vm1037, %v1096, 0.0
        %v1120 = vsel %vm1038, %v1100, 0.0
        %v1121 = vsel %vm1039, %v1096, 0.0
        %v1122 = vsel %vm1040, %v1100, 0.0
        %v1123 = vsel %vm1041, %v1096, 0.0
        %v1124 = vsel %vm1042, %v1100, 0.0
        %v1125 = vsel %vm1043, %v1096, 0.0
        %v1126 = vsel %vm1044, %v1100, 0.0
        %v1127 = vsel %vm1045, %v1096, 0.0
        %v1128 = vsel %vm1046, %v1100, 0.0
        %v1129 = vsel %vm1047, %v1096, 0.0
        %v1130 = vsel %vm1048, %v1100, 0.0
        %v1131 = vsel %vm1049, %v1096, 0.0
        %v1132 = vsel %vm1050, %v1100, 0.0
        %v1133 = vsel %vm1051, %v1096, 0.0
        %v1134 = vsel %vm1052, %v1100, 0.0
        %v1135 = vsel %vm1053, %v1096, 0.0
        %v1136 = vsel %vm1054, %v1100, 0.0
        %v1137 = vsel %vm1055, %v1096, 0.0
        %v1138 = vsel %vm1056, %v1100, 0.0
        %v1139 = vsel %vm1057, %v1096, 0.0
        %v1140 = vsel %vm1058, %v1100, 0.0
        %v1141 = vsel %vm1059, %v1096, 0.0
        %v1142 = vsel %vm1060, %v1100, 0.0
        %v1143 = vsel %vm1061, %v1096, 0.0
        %v1144 = vsel %vm1062, %v1100, 0.0
        %v1145 = vsel %vm1063, %v1096, 0.0
        %v1146 = vsel %vm1064, %v1100, 0.0
        %v1147 = vsel %vm1065, %v1096, 0.0
        %v1148 = vsel %vm1066, %v1100, 0.0
        %v1149 = vsel %vm1067, %v1096, 0.0
        %v1150 = vsel %vm1068, %v1100, 0.0
        %v1151 = vsel %vm1069, %v1096, 0.0
        %v1152 = vsel %vm1070, %v1100, 0.0
        %v1153 = vsel %vm1071, %v1096, 0.0
        %v1154 = vsel %vm1072, %v1100, 0.0
        %v1155 = vsel %vm1073, %v1096, 0.0
        %v1156 = vsel %vm1074, %v1100, 0.0
        %v1157 = vsel %vm1075, %v1096, 0.0
        %v1158 = vsel %vm1076, %v1100, 0.0
        %v1159 = vsel %vm1077, %v1096, 0.0
        %v1160 = vsel %vm1078, %v1100, 0.0
        %v1161 = vsel %vm1079, %v1096, 0.0
        %v1162 = vsel %vm1080, %v1100, 0.0
        %v1163 = vsel %vm1081, %v1096, 0.0
        %v1164 = vsel %vm1082, %v1100, 0.0
        %v1165 = vadd.f32 %v939, %v1101
        %v1166 = vadd.f32 %v940, %v1102
        %v1167 = vadd.f32 %v941, %v1103
        %v1168 = vadd.f32 %v942, %v1104
        %v1169 = vadd.f32 %v943, %v1105
        %v1170 = vadd.f32 %v944, %v1106
        %v1171 = vadd.f32 %v945, %v1107
        %v1172 = vadd.f32 %v946, %v1108
        %v1173 = vadd.f32 %v947, %v1109
        %v1174 = vadd.f32 %v948, %v1110
        %v1175 = vadd.f32 %v949, %v1111
        %v1176 = vadd.f32 %v950, %v1112
        %v1177 = vadd.f32 %v951, %v1113
        %v1178 = vadd.f32 %v952, %v1114
        %v1179 = vadd.f32 %v953, %v1115
        %v1180 = vadd.f32 %v954, %v1116
        %v1181 = vadd.f32 %v955, %v1117
        %v1182 = vadd.f32 %v956, %v1118
        %v1183 = vadd.f32 %v957, %v1119
        %v1184 = vadd.f32 %v958, %v1120
        %v1185 = vadd.f32 %v959, %v1121
        %v1186 = vadd.f32 %v960, %v1122
        %v1187 = vadd.f32 %v961, %v1123
        %v1188 = vadd.f32 %v962, %v1124
        %v1189 = vadd.f32 %v963, %v1125
        %v1190 = vadd.f32 %v964, %v1126
        %v1191 = vadd.f32 %v965, %v1127
        %v1192 = vadd.f32 %v966, %v1128
        %v1193 = vadd.f32 %v967, %v1129
        %v1194 = vadd.f32 %v968, %v1130
        %v1195 = vadd.f32 %v969, %v1131
        %v1196 = vadd.f32 %v970, %v1132
        %v1197 = vadd.f32 %v971, %v1133
        %v1198 = vadd.f32 %v972, %v1134
        %v1199 = vadd.f32 %v973, %v1135
        %v1200 = vadd.f32 %v974, %v1136
        %v1201 = vadd.f32 %v975, %v1137
        %v1202 = vadd.f32 %v976, %v1138
        %v1203 = vadd.f32 %v977, %v1139
        %v1204 = vadd.f32 %v978, %v1140
        %v1205 = vadd.f32 %v979, %v1141
        %v1206 = vadd.f32 %v980, %v1142
        %v1207 = vadd.f32 %v981, %v1143
        %v1208 = vadd.f32 %v982, %v1144
        %v1209 = vadd.f32 %v983, %v1145
        %v1210 = vadd.f32 %v984, %v1146
        %v1211 = vadd.f32 %v985, %v1147
        %v1212 = vadd.f32 %v986, %v1148
        %v1213 = vadd.f32 %v987, %v1149
        %v1214 = vadd.f32 %v988, %v1150
        %v1215 = vadd.f32 %v989, %v1151
        %v1216 = vadd.f32 %v990, %v1152
        %v1217 = vadd.f32 %v991, %v1153
        %v1218 = vadd.f32 %v992, %v1154
        %v1219 = vadd.f32 %v993, %v1155
        %v1220 = vadd.f32 %v994, %v1156
        %v1221 = vadd.f32 %v995, %v1157
        %v1222 = vadd.f32 %v996, %v1158
        %v1223 = vadd.f32 %v997, %v1159
        %v1224 = vadd.f32 %v998, %v1160
        %v1225 = vadd.f32 %v999, %v1161
        %v1226 = vadd.f32 %v1000, %v1162
        %v1227 = vadd.f32 %v1001, %v1163
        %v1228 = vadd.f32 %v1002, %v1164
        %v1229 = vpack.c.bf16 %v1167, %v1165
        %v1230 = vpack.c.bf16 %v1168, %v1166
        %v1231 = vpack.c.bf16 %v1171, %v1169
        %v1232 = vpack.c.bf16 %v1172, %v1170
        %v1233 = vpack.c.bf16 %v1175, %v1173
        %v1234 = vpack.c.bf16 %v1176, %v1174
        %v1235 = vpack.c.bf16 %v1179, %v1177
        %v1236 = vpack.c.bf16 %v1180, %v1178
        %v1237 = vpack.c.bf16 %v1183, %v1181
        %v1238 = vpack.c.bf16 %v1184, %v1182
        %v1239 = vpack.c.bf16 %v1187, %v1185
        %v1240 = vpack.c.bf16 %v1188, %v1186
        %v1241 = vpack.c.bf16 %v1191, %v1189
        %v1242 = vpack.c.bf16 %v1192, %v1190
        %v1243 = vpack.c.bf16 %v1195, %v1193
        %v1244 = vpack.c.bf16 %v1196, %v1194
        %v1245 = vpack.c.bf16 %v1199, %v1197
        %v1246 = vpack.c.bf16 %v1200, %v1198
        %v1247 = vpack.c.bf16 %v1203, %v1201
        %v1248 = vpack.c.bf16 %v1204, %v1202
        %v1249 = vpack.c.bf16 %v1207, %v1205
        %v1250 = vpack.c.bf16 %v1208, %v1206
        %v1251 = vpack.c.bf16 %v1211, %v1209
        %v1252 = vpack.c.bf16 %v1212, %v1210
        %v1253 = vpack.c.bf16 %v1215, %v1213
        %v1254 = vpack.c.bf16 %v1216, %v1214
        %v1255 = vpack.c.bf16 %v1219, %v1217
        %v1256 = vpack.c.bf16 %v1220, %v1218
        %v1257 = vpack.c.bf16 %v1223, %v1221
        %v1258 = vpack.c.bf16 %v1224, %v1222
        %v1259 = vpack.c.bf16 %v1227, %v1225
        %v1260 = vpack.c.bf16 %v1228, %v1226
        %v1263 = vunpack.c.l.b16 %v287
        %v1264 = vunpack.c.h.b16 %v287
        %v1265 = vunpack.c.l.b16 %v288
        %v1266 = vunpack.c.h.b16 %v288
        %v1267 = vpack.c.b16 %v1265, %v1263
        %v1268 = vpack.c.b16 %v1266, %v1264
        %1271 = vmatprep.subr.bf16.mxu0 %v1230
        %1272 = vmatpush1.bf16.msra.mxu0 %v1229
        %1273 = vmatprep.subr.bf16.mxu0 %v1232
        %1274 = vmatpush1.bf16.msra.mxu0 %v1231
        %1275 = vmatprep.subr.bf16.mxu0 %v1234
        %1276 = vmatpush1.bf16.msra.mxu0 %v1233
        %1277 = vmatprep.subr.bf16.mxu0 %v1236
        %1278 = vmatpush1.bf16.msra.mxu0 %v1235
        %1279 = vmatprep.subr.bf16.mxu0 %v1238
        %1280 = vmatpush1.bf16.msra.mxu0 %v1237
        %1281 = vmatprep.subr.bf16.mxu0 %v1240
        %1282 = vmatpush1.bf16.msra.mxu0 %v1239
        %1283 = vmatprep.subr.bf16.mxu0 %v1242
        %1284 = vmatpush1.bf16.msra.mxu0 %v1241
        %1285 = vmatprep.subr.bf16.mxu0 %v1244
        %1286 = vmatpush1.bf16.msra.mxu0 %v1243
        %1287 = vmatprep.subr.bf16.mxu0 %v1246
        %1288 = vmatpush1.bf16.msra.mxu0 %v1245
        %1289 = vmatprep.subr.bf16.mxu0 %v1248
        %1290 = vmatpush1.bf16.msra.mxu0 %v1247
        %1291 = vmatprep.subr.bf16.mxu0 %v1250
        %1292 = vmatpush1.bf16.msra.mxu0 %v1249
        %1293 = vmatprep.subr.bf16.mxu0 %v1252
        %1294 = vmatpush1.bf16.msra.mxu0 %v1251
        %1295 = vmatprep.subr.bf16.mxu0 %v1254
        %1296 = vmatpush1.bf16.msra.mxu0 %v1253
        %1297 = vmatprep.subr.bf16.mxu0 %v1256
        %1298 = vmatpush1.bf16.msra.mxu0 %v1255
        %1299 = vmatprep.subr.bf16.mxu0 %v1258
        %1300 = vmatpush1.bf16.msra.mxu0 %v1257
        %1301 = vmatprep.subr.bf16.mxu0 %v1260
        %1302 = vmatpush1.bf16.msra.mxu0 %v1259
        %1303 = vmatprep.mubr.bf16.mxu0 %v1268
        %1304 = vmatmul.mubr.bf16.gmra.mrb[0].mxu0 %v1267
        %v1305 = vpop.f32.mrb[0].mxu0
        %v1306 = vadd.f32 0.0, %v1305
        %v1307 = vpop.f32.mrb[0].mxu0
        %v1308 = vadd.f32 0.0, %v1307
        %v1309 = vpop.f32.mrb[0].mxu0
        %v1310 = vadd.f32 0.0, %v1309
        %v1311 = vpop.f32.mrb[0].mxu0
        %v1312 = vadd.f32 0.0, %v1311
        %1313 = vdwg.mxu0
        %1314 = vst [vmem:[%s283] sm:$0xff] %v1306
        %1315 = vst [vmem:[%s283 + $0x8] sm:$0xff] %v1308
        %1316 = vst [vmem:[%s283 + $0x10] sm:$0xff] %v1310
        %1317 = vst [vmem:[%s283 + $0x18] sm:$0xff] %v1312
        %s1318 = sand.u32 %s127, 1
        %s1319 = scalar_lea.sflag [#allocation4], %s1318
        %s1320 = sand.u32 %s127, 1
        %s1321 = smul.addr %s1320, 32
        %s1322 = scalar_lea.vmem [#allocation8], %s1321
        // Predicated region
        $region45: #{tpu_custom_call.1} parent=31 // pred_check
          %p1323 = pneg %p137
        $region46: #{tpu_custom_call.1} parent=31 // pred_check_branch
          %1325 = sbr.rel (%p1323) target = $region48
        $region47: #{tpu_custom_call.1} parent=31 // pred_region
          %s1326 = smul.u32 2, %s28
          %s1328 = ssub.s32 512, 512
          %1329 = vsyncadd %s1319, %s1328
          %s1330 = smul.addr %s27, 4
          %s1331 = sadd.s32 %s1326, %s1330
          %s1332 = smul.addr %s1331, 128
          %s1333 = scalar_lea.hbm %s3, %s1332
          %s1334 = sshll.u32 %s1322, 4
          %s1335 = int_to_ptr.vmem [resolvable:$true] %s1334
          %1340 = dma.vmem_to_hbm [thread:$0]  %s1335, 512, %s1333, %s1319, 256, 256, 16
        $region48: #{tpu_custom_call.1} parent=31 // pred_fallthru
          _
      $region32: #{tpu_custom_call.1} parent=5 // pred_fallthru
        _
      %p1341 = scmp.le.s32.totalorder 2, %s18
      // Predicated region
      $region49: #{tpu_custom_call.1} parent=5 // pred_check
        %p1342 = pneg %p1341
      $region50: #{tpu_custom_call.1} parent=5 // pred_check_branch
        %1344 = sbr.rel (%p1342) target = $region52
      $region51: #{tpu_custom_call.1} parent=5 // pred_region
        %s1345 = ssub.s32 %s18, 2
        // Predicated region
        $region53: #{tpu_custom_call.1} parent=51 // pred_check
          %p1346 = pneg %p143
        $region54: #{tpu_custom_call.1} parent=51 // pred_check_branch
          %1348 = sbr.rel (%p1346) target = $region56
        $region55: #{tpu_custom_call.1} parent=51 // pred_region
          %s1349 = sand.u32 %s128, 1
          %s1350 = scalar_lea.sflag [#allocation4], %s1349
          %s1351 = sand.u32 %s128, 1
          %s1352 = smul.addr %s1351, 32
          %s1353 = scalar_lea.vmem [#allocation8], %s1352
          %1354 = dma.done %s1350, 512
        $region56: #{tpu_custom_call.1} parent=51 // pred_fallthru
          _
      $region52: #{tpu_custom_call.1} parent=5 // pred_fallthru
        _
    $region6: #{tpu_custom_call.1} parent=1 // loop_footer
      %s22 = sadd.s32 1, %s18
    $region7: #{tpu_custom_call.1} parent=1 // loop_footer_branch
      %17 = sbr.rel target = $region3
    $region8: #{tpu_custom_call.1} parent=1 // loop_exit
      _
    %1355 = vsyncpa [#allocation3], 1
    %s1356 = scalar_lea.sflag [#allocation3], 1
    %1357 = vsyncpa %s1356, 1
    %1358 = vsyncpa [#allocation6], 1
    %s1359 = scalar_lea.sflag [#allocation6], 1
    %1360 = vsyncpa %s1359, 1
    %1361 = vsyncpa [#allocation4], 1
    %s1362 = scalar_lea.sflag [#allocation4], 1
    %1363 = vsyncpa %s1362, 1

</llo_original>
